<compile_context>
chip_gen: v7x
topology: tpu7x:2x2x1
jax: 0.10.0
libtpu: 0.0.40
codegen_flags: <defaults>
</compile_context>

<pallas_src>
import functools

import jax
import jax.numpy as jnp
from jax import lax
from jax.experimental import pallas as pl
from jax.experimental.pallas import tpu as pltpu

_BIG = 1e30  # sentinel distance for non-code lanes


def _latent_action_kernel(s0_ref, s1_ref, w0t_ref, w1t_ref, bsum_ref,
                          w2_ref, b2_ref, esqp_ref, embp_ref,
                          packed_ref, counts_ref,
                          *, actual_b, tb, commitment_cost, pack_width):
    i = pl.program_id(0)
    mm_dtype = w0t_ref.dtype

    # fc_0 + fc_1 (bf16 MXU, f32 accumulate) + ReLU.  In-kernel cast keeps the
    # streamed activations to a single HBM pass.
    a0 = s0_ref[...].astype(mm_dtype)
    a1 = s1_ref[...].astype(mm_dtype)
    h = jnp.dot(a0, w0t_ref[...], preferred_element_type=jnp.float32)
    h = h + jnp.dot(a1, w1t_ref[...], preferred_element_type=jnp.float32)
    h = jnp.maximum(h + bsum_ref[...], 0.0)                       # [TB, H]

    # One MXU pass producing [flat_x | x.e^T | 0-pad] across 128 lanes:
    # W2[:, :D] = Wf.T, W2[:, D:D+NE] = Wf.T @ E.T (folded in the wrapper).
    out2 = jnp.dot(h, w2_ref[...], preferred_element_type=jnp.float32) + b2_ref[...]

    emb_p = embp_ref[...]                                         # [D, N2] padded codebook
    D, N2 = emb_p.shape

    # Squared distance up to a per-row constant (||x||^2 dropped; argmin-
    # invariant).  Non-code lanes hold +BIG so they never win the argmin.
    dist = esqp_ref[...] - 2.0 * out2                             # [TB, N2]

    # argmin along lanes (first occurrence, matching torch.argmin tie-break).
    iota = lax.broadcasted_iota(jnp.int32, dist.shape, 1)
    min_d = jnp.min(dist, axis=1, keepdims=True)
    idxp = jnp.min(jnp.where(dist == min_d, iota, N2),
                   axis=1, keepdims=True)                         # [TB, 1], in [D, D+NE)
    one_hot = (iota == idxp).astype(jnp.float32)                  # [TB, N2]

    # Quantized code rows via a D-step select-sum over the resident padded
    # codebook (avoids a degenerate one_hot @ emb MXU op).
    cols = []
    for d in range(D):
        cols.append(jnp.sum(one_hot * emb_p[d:d + 1, :],
                            axis=1, keepdims=True))               # [TB, 1]
    quantized = jnp.concatenate(cols, axis=1)                     # [TB, D]

    # Losses: e_latent and q_latent are numerically identical in the forward.
    flat_x = out2[:, 0:D]                                         # prefix lane slice
    diff = quantized - flat_x
    e_latent = jnp.mean(diff * diff, axis=1, keepdims=True)       # [TB, 1]
    loss = (1.0 + commitment_cost) * e_latent

    # Straight-through output equals the quantized vector in the forward pass.
    z = quantized

    # Pack z | loss | idx (exact as float, idx < NE << 2^24) into one slab.
    idx_f = (idxp - D).astype(jnp.float32)
    pieces = [z, loss, idx_f]
    pad = pack_width - (D + 2)
    if pad > 0:
        pieces.append(jnp.zeros((z.shape[0], pad), jnp.float32))
    packed_ref[...] = jnp.concatenate(pieces, axis=1)             # [TB, pack_width]

    # Per-tile one-hot column counts over *valid* rows only (padding rows of a
    # ragged last tile are excluded); perplexity is finished in the wrapper.
    rows = i * tb + lax.broadcasted_iota(jnp.int32, (tb, 1), 0)
    valid = (rows < actual_b).astype(jnp.float32)                 # [TB, 1]
    counts_ref[0] = jnp.sum(one_hot * valid, axis=0, keepdims=True)  # [1, N2]


def prepare_latent_action_params(params, *, use_bf16=True):
    """One-time parameter preparation (do NOT call per forward pass)."""
    W0, b0, W1, b1, Wf, bf, E = params
    H, C = W0.shape
    NE, D = E.shape
    N2 = ((D + NE + 127) // 128) * 128         # lane-padded width for the fused slab

    f32 = jnp.float32
    mm_dtype = jnp.bfloat16 if use_bf16 else f32

    W0T = W0.T.astype(mm_dtype)                # [C, H] resident
    W1T = W1.T.astype(mm_dtype)                # [C, H] resident
    bsum = (b0 + b1).astype(f32).reshape(1, H)

    Wf_t = Wf.T.astype(f32)                    # [H, D]
    E_f = E.astype(f32)                        # [NE, D]

    # Fused fc + codebook projection: one [H, N2] weight, one [1, N2] bias.
    W2 = jnp.zeros((H, N2), f32)
    W2 = W2.at[:, 0:D].set(Wf_t)
    W2 = W2.at[:, D:D + NE].set(Wf_t @ E_f.T)
    b2 = jnp.zeros((1, N2), f32)
    b2 = b2.at[0, 0:D].set(bf.astype(f32))
    b2 = b2.at[0, D:D + NE].set(bf.astype(f32) @ E_f.T)

    # ||e||^2 on code lanes, +BIG elsewhere (flat_x lanes and padding).
    esqp = jnp.full((1, N2), _BIG, f32)
    esqp = esqp.at[0, D:D + NE].set(jnp.sum(E_f * E_f, axis=1))

    # Codebook transposed and placed on the same lanes as the one-hot.
    embp = jnp.zeros((D, N2), f32)
    embp = embp.at[:, D:D + NE].set(E_f.T)

    return dict(W0T=W0T, W1T=W1T, bsum=bsum, W2=W2, b2=b2,
                esqp=esqp, embp=embp, C=C, H=H, D=D, NE=NE, N2=N2)


def latent_action_gen(s0, s1, prep, *, commitment_cost=1.0, tb_max=512,
                      vmem_limit_bytes=48 * 1024 * 1024):
    """Fused LatentActionGen forward. Returns (z, loss, perplexity, idx)."""
    B, C = s0.shape
    assert s1.shape == (B, C) and C == prep["C"]
    H, D, NE, N2 = prep["H"], prep["D"], prep["NE"], prep["N2"]

    # Batch tile: multiple of 8; capped so two double-buffered streamed input
    # tiles stay within a v7x-safe VMEM budget; split >=2 ways when B allows so
    # both v7x TensorCores get work.  (Raise tb_max to 1024 on v5e/v6e; the
    # resident weights could additionally be marked pl.Buffered(1) there.)
    bytes_per_row = 2 * 2 * C * s0.dtype.itemsize        # 2 inputs x double buffer
    vmem_budget = 32 * 1024 * 1024
    tb_cap = max(8, (vmem_budget // bytes_per_row) // 8 * 8)
    tb_half = max(8, (((B + 1) // 2) + 7) // 8 * 8)       # >=2 tiles for moderate B
    TB = max(8, min(tb_max, tb_cap, tb_half))
    nt = pl.cdiv(B, TB)

    P = ((D + 2 + 7) // 8) * 8                            # packed width (z|loss|idx|pad)

    kernel = functools.partial(
        _latent_action_kernel, actual_b=B, tb=TB,
        commitment_cost=float(commitment_cost), pack_width=P)

    w_itemsize = prep["W0T"].dtype.itemsize
    cost = pl.CostEstimate(
        flops=int(4 * B * C * H + 2 * B * H * N2),
        transcendentals=0,
        bytes_accessed=int(2 * B * C * s0.dtype.itemsize
                           + 2 * C * H * w_itemsize
                           + 4 * (H * N2 + D * N2 + 3 * N2 + H)
                           + 4 * B * P + 4 * nt * N2))

    packed, counts = pl.pallas_call(
        kernel,
        out_shape=(jax.ShapeDtypeStruct((B, P), jnp.float32),
                   jax.ShapeDtypeStruct((nt, 1, N2), jnp.float32)),
        grid=(nt,),
        in_specs=[
            pl.BlockSpec((TB, C), lambda i: (i, 0)),      # streamed s0
            pl.BlockSpec((TB, C), lambda i: (i, 0)),      # streamed s1
            pl.BlockSpec((C, H), lambda i: (0, 0)),       # resident W0.T
            pl.BlockSpec((C, H), lambda i: (0, 0)),       # resident W1.T
            pl.BlockSpec((1, H), lambda i: (0, 0)),       # resident b0+b1
            pl.BlockSpec((H, N2), lambda i: (0, 0)),      # resident fused [Wf.T | Wf.T@E.T]
            pl.BlockSpec((1, N2), lambda i: (0, 0)),      # resident fused bias
            pl.BlockSpec((1, N2), lambda i: (0, 0)),      # resident ||e||^2 (+BIG pad)
            pl.BlockSpec((D, N2), lambda i: (0, 0)),      # resident padded codebook^T
        ],
        out_specs=(
            pl.BlockSpec((TB, P), lambda i: (i, 0)),
            pl.BlockSpec((1, 1, N2), lambda i: (i, 0, 0)),
        ),
        compiler_params=pltpu.CompilerParams(
            dimension_semantics=("parallel",),
            vmem_limit_bytes=int(vmem_limit_bytes)),
        cost_estimate=cost,
    )(s0, s1, prep["W0T"], prep["W1T"], prep["bsum"],
      prep["W2"], prep["b2"], prep["esqp"], prep["embp"])

    z = packed[:, :D]
    loss = packed[:, D]
    idx = packed[:, D + 1].astype(jnp.int32)

    # Finish perplexity with a tiny XLA reduction (keeps the batch grid parallel).
    counts_total = jnp.sum(counts, axis=(0, 1))[D:D + NE]         # [NE]
    avg_probs = counts_total / jnp.float32(B)
    perplexity = jnp.exp(-jnp.sum(avg_probs * jnp.log(avg_probs + 1e-10)))

    return z, loss, perplexity, idx


def init_params(key, in_channel=256, hidden=128, emb_dim=4, num_emb=30):
    """Deterministic synthetic parameters matching the module's shapes/init scales."""
    k = jax.random.split(key, 7)
    lim0 = 1.0 / jnp.sqrt(jnp.float32(in_channel))
    W0 = jax.random.uniform(k[0], (hidden, in_channel), jnp.float32, -lim0, lim0)
    b0 = jax.random.uniform(k[1], (hidden,), jnp.float32, -lim0, lim0)
    W1 = jax.random.uniform(k[2], (hidden, in_channel), jnp.float32, -lim0, lim0)
    b1 = jax.random.uniform(k[3], (hidden,), jnp.float32, -lim0, lim0)
    limf = 1.0 / jnp.sqrt(jnp.float32(hidden))
    Wf = jax.random.uniform(k[4], (emb_dim, hidden), jnp.float32, -limf, limf)
    bf = jax.random.uniform(k[5], (emb_dim,), jnp.float32, -limf, limf)
    E = jax.random.uniform(k[6], (num_emb, emb_dim), jnp.float32,
                           -1.0 / num_emb, 1.0 / num_emb)
    return (W0, b0, W1, b1, Wf, bf, E)


def _reference(s0, s1, params, commitment_cost=1.0):
    """Pure-JAX forward matching the PyTorch module (for verification)."""
    W0, b0, W1, b1, Wf, bf, E = params
    x = jnp.maximum(s0 @ W0.T + b0 + s1 @ W1.T + b1, 0.0)
    flat_x = x @ Wf.T + bf
    dist = (jnp.sum(flat_x ** 2, axis=1, keepdims=True)
            + jnp.sum(E ** 2, axis=1) - 2.0 * flat_x @ E.T)
    idx = jnp.argmin(dist, axis=1)
    q = E[idx]
    e_l = jnp.mean((q - flat_x) ** 2, axis=1)
    loss = e_l + commitment_cost * e_l
    enc = jax.nn.one_hot(idx, E.shape[0], dtype=jnp.float32)
    avg = jnp.mean(enc, axis=0)
    perp = jnp.exp(-jnp.sum(avg * jnp.log(avg + 1e-10)))
    return q, loss, perp, idx


if __name__ == "__main__":
    key = jax.random.PRNGKey(0)
    kp, ks0, ks1 = jax.random.split(key, 3)

    B, C = 12, 256          # small demo shapes (module default in_channel is 4096)
    params = init_params(kp, in_channel=C, hidden=128, emb_dim=4, num_emb=30)
    s0 = jax.random.normal(ks0, (B, C), jnp.float32)
    s1 = jax.random.normal(ks1, (B, C), jnp.float32)

    # Default bf16-matmul path (2 tiles, ragged last tile masked in-kernel).
    prep_bf16 = prepare_latent_action_params(params, use_bf16=True)
    z, loss, perp, idx = latent_action_gen(s0, s1, prep_bf16)
    jax.block_until_ready((z, loss, perp, idx))
    assert z.shape == (B, 4) and loss.shape == (B,)
    assert perp.shape == () and idx.shape == (B,) and idx.dtype == jnp.int32

    # f32 path checked against a pure-JAX reference of the PyTorch forward.
    prep_f32 = prepare_latent_action_params(params, use_bf16=False)
    z32, loss32, perp32, idx32 = latent_action_gen(s0, s1, prep_f32)
    zr, lossr, perpr, idxr = _reference(s0, s1, params, commitment_cost=1.0)
    jax.block_until_ready((z32, loss32, perp32, idx32))
    assert bool(jnp.all(idx32 == idxr))
    assert bool(jnp.allclose(z32, zr, atol=1e-5, rtol=1e-4))
    assert bool(jnp.allclose(loss32, lossr, atol=1e-4, rtol=1e-3))
    assert bool(jnp.allclose(perp32, perpr, atol=1e-4, rtol=1e-4))

    print("KERNEL_OK")
</pallas_src>

<mosaic_0001>
module attributes {stable_mosaic.version = 11 : i64} {
  func.func @_latent_action_kernel(%arg0: i32, %arg1: memref<8x256xf32, #tpu.memory_space<vmem>>, %arg2: memref<8x256xf32, #tpu.memory_space<vmem>>, %arg3: memref<256x128xbf16, #tpu.memory_space<vmem>>, %arg4: memref<256x128xbf16, #tpu.memory_space<vmem>>, %arg5: memref<1x128xf32, #tpu.memory_space<vmem>>, %arg6: memref<128x128xf32, #tpu.memory_space<vmem>>, %arg7: memref<1x128xf32, #tpu.memory_space<vmem>>, %arg8: memref<1x128xf32, #tpu.memory_space<vmem>>, %arg9: memref<4x128xf32, #tpu.memory_space<vmem>>, %arg10: memref<8x8xf32, #tpu.memory_space<vmem>>, %arg11: memref<1x1x128xf32, #tpu.memory_space<vmem>>) attributes {dimension_semantics = [#tpu.dimension_semantics<parallel>], iteration_bounds = array<i64: 2>, scalar_prefetch = 0 : i64, scratch_operands = 0 : i64, tpu.core_type = #tpu.core_type<tc>, window_params = [{transform_indices = @transform_0, window_bounds = array<i64: 8, 256>}, {transform_indices = @transform_1, window_bounds = array<i64: 8, 256>}, {pipeline_mode = #tpu.pipeline_mode<synchronous>, transform_indices = @transform_2, window_bounds = array<i64: 256, 128>}, {pipeline_mode = #tpu.pipeline_mode<synchronous>, transform_indices = @transform_3, window_bounds = array<i64: 256, 128>}, {pipeline_mode = #tpu.pipeline_mode<synchronous>, transform_indices = @transform_4, window_bounds = array<i64: 1, 128>}, {pipeline_mode = #tpu.pipeline_mode<synchronous>, transform_indices = @transform_5, window_bounds = array<i64: 128, 128>}, {pipeline_mode = #tpu.pipeline_mode<synchronous>, transform_indices = @transform_6, window_bounds = array<i64: 1, 128>}, {pipeline_mode = #tpu.pipeline_mode<synchronous>, transform_indices = @transform_7, window_bounds = array<i64: 1, 128>}, {pipeline_mode = #tpu.pipeline_mode<synchronous>, transform_indices = @transform_8, window_bounds = array<i64: 4, 128>}, {transform_indices = @transform_9, window_bounds = array<i64: 8, 8>}, {transform_indices = @transform_10, window_bounds = array<i64: 1, 1, 128>}]} {
    %c0 = arith.constant 0 : index
    %c0_0 = arith.constant 0 : index
    %0 = vector.load %arg1[%c0, %c0_0] : memref<8x256xf32, #tpu.memory_space<vmem>>, vector<8x256xf32>
    %1 = arith.truncf %0 : vector<8x256xf32> to vector<8x256xbf16>
    %c0_1 = arith.constant 0 : index
    %c0_2 = arith.constant 0 : index
    %2 = vector.load %arg2[%c0_1, %c0_2] : memref<8x256xf32, #tpu.memory_space<vmem>>, vector<8x256xf32>
    %3 = arith.truncf %2 : vector<8x256xf32> to vector<8x256xbf16>
    %c0_3 = arith.constant 0 : index
    %c0_4 = arith.constant 0 : index
    %4 = vector.load %arg3[%c0_3, %c0_4] : memref<256x128xbf16, #tpu.memory_space<vmem>>, vector<256x128xbf16>
    %cst = arith.constant dense<0.000000e+00> : vector<8x128xf32>
    %5 = tpu.matmul %1, %4, %cst {dimension_numbers = #tpu.dot_dimension_numbers<[1], [0], [0], [1], [0, 0, 1, 1], [], []>} : vector<8x256xbf16>, vector<256x128xbf16>, vector<8x128xf32> -> vector<8x128xf32>
    %c0_5 = arith.constant 0 : index
    %c0_6 = arith.constant 0 : index
    %6 = vector.load %arg4[%c0_5, %c0_6] : memref<256x128xbf16, #tpu.memory_space<vmem>>, vector<256x128xbf16>
    %cst_7 = arith.constant dense<0.000000e+00> : vector<8x128xf32>
    %7 = tpu.matmul %3, %6, %cst_7 {dimension_numbers = #tpu.dot_dimension_numbers<[1], [0], [0], [1], [0, 0, 1, 1], [], []>} : vector<8x256xbf16>, vector<256x128xbf16>, vector<8x128xf32> -> vector<8x128xf32>
    %8 = arith.addf %5, %7 : vector<8x128xf32>
    %c0_8 = arith.constant 0 : index
    %c0_9 = arith.constant 0 : index
    %9 = vector.load %arg5[%c0_8, %c0_9] : memref<1x128xf32, #tpu.memory_space<vmem>>, vector<1x128xf32>
    %10 = vector.broadcast %9 : vector<1x128xf32> to vector<8x128xf32>
    %11 = arith.addf %8, %10 : vector<8x128xf32>
    %cst_10 = arith.constant 0.000000e+00 : f32
    %12 = vector.broadcast %cst_10 : f32 to vector<8x128xf32>
    %13 = arith.maximumf %11, %12 : vector<8x128xf32>
    %c0_11 = arith.constant 0 : index
    %c0_12 = arith.constant 0 : index
    %14 = vector.load %arg6[%c0_11, %c0_12] : memref<128x128xf32, #tpu.memory_space<vmem>>, vector<128x128xf32>
    %cst_13 = arith.constant dense<0.000000e+00> : vector<8x128xf32>
    %15 = tpu.matmul %13, %14, %cst_13 {dimension_numbers = #tpu.dot_dimension_numbers<[1], [0], [0], [1], [0, 0, 1, 1], [], []>} : vector<8x128xf32>, vector<128x128xf32>, vector<8x128xf32> -> vector<8x128xf32>
    %c0_14 = arith.constant 0 : index
    %c0_15 = arith.constant 0 : index
    %16 = vector.load %arg7[%c0_14, %c0_15] : memref<1x128xf32, #tpu.memory_space<vmem>>, vector<1x128xf32>
    %17 = vector.broadcast %16 : vector<1x128xf32> to vector<8x128xf32>
    %18 = arith.addf %15, %17 : vector<8x128xf32>
    %c0_16 = arith.constant 0 : index
    %c0_17 = arith.constant 0 : index
    %19 = vector.load %arg9[%c0_16, %c0_17] : memref<4x128xf32, #tpu.memory_space<vmem>>, vector<4x128xf32>
    %c0_18 = arith.constant 0 : index
    %c0_19 = arith.constant 0 : index
    %20 = vector.load %arg8[%c0_18, %c0_19] : memref<1x128xf32, #tpu.memory_space<vmem>>, vector<1x128xf32>
    %cst_20 = arith.constant 2.000000e+00 : f32
    %21 = vector.broadcast %cst_20 : f32 to vector<8x128xf32>
    %22 = arith.mulf %21, %18 : vector<8x128xf32>
    %23 = vector.broadcast %20 : vector<1x128xf32> to vector<8x128xf32>
    %24 = arith.subf %23, %22 : vector<8x128xf32>
    %25 = tpu.iota {dimensions = array<i32: 1>} : vector<8x128xi32>
    %cst_21 = arith.constant dense<0x7F800000> : vector<8xf32>
    %26 = vector.multi_reduction <minimumf>, %24, %cst_21 [1] : vector<8x128xf32> to vector<8xf32>
    %27 = vector.shape_cast %26 : vector<8xf32> to vector<8x1xf32>
    %28 = vector.broadcast %27 : vector<8x1xf32> to vector<8x128xf32>
    %29 = arith.cmpf oeq, %24, %28 : vector<8x128xf32>
    %c128_i32 = arith.constant 128 : i32
    %30 = vector.broadcast %c128_i32 : i32 to vector<8x128xi32>
    %31 = arith.select %29, %25, %30 : vector<8x128xi1>, vector<8x128xi32>
    %cst_22 = arith.constant dense<2147483647> : vector<8xi32>
    %32 = vector.multi_reduction <minsi>, %31, %cst_22 [1] : vector<8x128xi32> to vector<8xi32>
    %33 = vector.shape_cast %32 : vector<8xi32> to vector<8x1xi32>
    %34 = vector.broadcast %33 : vector<8x1xi32> to vector<8x128xi32>
    %35 = arith.cmpi eq, %25, %34 : vector<8x128xi32>
    %36 = arith.extui %35 : vector<8x128xi1> to vector<8x128xi32>
    %37 = arith.sitofp %36 : vector<8x128xi32> to vector<8x128xf32>
    %38 = vector.extract_strided_slice %19 {offsets = [0, 0], sizes = [1, 128], strides = [1, 1]} : vector<4x128xf32> to vector<1x128xf32>
    %39 = vector.broadcast %38 : vector<1x128xf32> to vector<8x128xf32>
    %40 = arith.mulf %37, %39 : vector<8x128xf32>
    %cst_23 = arith.constant dense<0.000000e+00> : vector<8xf32>
    %41 = vector.multi_reduction <add>, %40, %cst_23 [1] : vector<8x128xf32> to vector<8xf32>
    %42 = vector.shape_cast %41 : vector<8xf32> to vector<8x1xf32>
    %43 = vector.extract_strided_slice %19 {offsets = [1, 0], sizes = [1, 128], strides = [1, 1]} : vector<4x128xf32> to vector<1x128xf32>
    %44 = vector.broadcast %43 : vector<1x128xf32> to vector<8x128xf32>
    %45 = arith.mulf %37, %44 : vector<8x128xf32>
    %cst_24 = arith.constant dense<0.000000e+00> : vector<8xf32>
    %46 = vector.multi_reduction <add>, %45, %cst_24 [1] : vector<8x128xf32> to vector<8xf32>
    %47 = vector.shape_cast %46 : vector<8xf32> to vector<8x1xf32>
    %48 = vector.extract_strided_slice %19 {offsets = [2, 0], sizes = [1, 128], strides = [1, 1]} : vector<4x128xf32> to vector<1x128xf32>
    %49 = vector.broadcast %48 : vector<1x128xf32> to vector<8x128xf32>
    %50 = arith.mulf %37, %49 : vector<8x128xf32>
    %cst_25 = arith.constant dense<0.000000e+00> : vector<8xf32>
    %51 = vector.multi_reduction <add>, %50, %cst_25 [1] : vector<8x128xf32> to vector<8xf32>
    %52 = vector.shape_cast %51 : vector<8xf32> to vector<8x1xf32>
    %53 = vector.extract_strided_slice %19 {offsets = [3, 0], sizes = [1, 128], strides = [1, 1]} : vector<4x128xf32> to vector<1x128xf32>
    %54 = vector.broadcast %53 : vector<1x128xf32> to vector<8x128xf32>
    %55 = arith.mulf %37, %54 : vector<8x128xf32>
    %cst_26 = arith.constant dense<0.000000e+00> : vector<8xf32>
    %56 = vector.multi_reduction <add>, %55, %cst_26 [1] : vector<8x128xf32> to vector<8xf32>
    %57 = vector.shape_cast %56 : vector<8xf32> to vector<8x1xf32>
    %58 = tpu.concatenate %42, %47, %52, %57 in 1 : vector<8x1xf32>, vector<8x1xf32>, vector<8x1xf32>, vector<8x1xf32> -> vector<8x4xf32>
    %59 = vector.extract_strided_slice %18 {offsets = [0, 0], sizes = [8, 4], strides = [1, 1]} : vector<8x128xf32> to vector<8x4xf32>
    %60 = arith.subf %58, %59 : vector<8x4xf32>
    %61 = arith.mulf %60, %60 : vector<8x4xf32>
    %cst_27 = arith.constant dense<0.000000e+00> : vector<8xf32>
    %62 = vector.multi_reduction <add>, %61, %cst_27 [1] : vector<8x4xf32> to vector<8xf32>
    %63 = vector.shape_cast %62 : vector<8xf32> to vector<8x1xf32>
    %cst_28 = arith.constant 4.000000e+00 : f32
    %64 = vector.broadcast %cst_28 : f32 to vector<8x1xf32>
    %65 = arith.divf %63, %64 : vector<8x1xf32>
    %cst_29 = arith.constant 2.000000e+00 : f32
    %66 = vector.broadcast %cst_29 : f32 to vector<8x1xf32>
    %67 = arith.mulf %66, %65 : vector<8x1xf32>
    %c4_i32 = arith.constant 4 : i32
    %68 = vector.broadcast %c4_i32 : i32 to vector<8x1xi32>
    %69 = arith.subi %33, %68 : vector<8x1xi32>
    %70 = arith.sitofp %69 : vector<8x1xi32> to vector<8x1xf32>
    %cst_30 = arith.constant 0.000000e+00 : f32
    %71 = vector.broadcast %cst_30 : f32 to vector<8x2xf32>
    %72 = tpu.concatenate %58, %67, %70, %71 in 1 : vector<8x4xf32>, vector<8x1xf32>, vector<8x1xf32>, vector<8x2xf32> -> vector<8x8xf32>
    %c0_31 = arith.constant 0 : index
    %c0_32 = arith.constant 0 : index
    %73 = vector.load %arg10[%c0_31, %c0_32] : memref<8x8xf32, #tpu.memory_space<vmem>>, vector<8x8xf32>
    tpu.vector_store %arg10[%c0_31, %c0_32], %72 {strides = array<i32>} : memref<8x8xf32, #tpu.memory_space<vmem>>, vector<8x8xf32>,
    %c8_i32 = arith.constant 8 : i32
    %74 = arith.muli %arg0, %c8_i32 : i32
    %75 = tpu.iota {dimensions = array<i32: 0>} : vector<8x1xi32>
    %76 = vector.broadcast %74 : i32 to vector<8x1xi32>
    %77 = arith.addi %76, %75 : vector<8x1xi32>
    %c12_i32 = arith.constant 12 : i32
    %78 = vector.broadcast %c12_i32 : i32 to vector<8x1xi32>
    %79 = arith.cmpi slt, %77, %78 : vector<8x1xi32>
    %80 = arith.extui %79 : vector<8x1xi1> to vector<8x1xi32>
    %81 = arith.sitofp %80 : vector<8x1xi32> to vector<8x1xf32>
    %82 = vector.broadcast %81 : vector<8x1xf32> to vector<8x128xf32>
    %83 = arith.mulf %37, %82 : vector<8x128xf32>
    %cst_33 = arith.constant dense<0.000000e+00> : vector<128xf32>
    %84 = vector.multi_reduction <add>, %83, %cst_33 [0] : vector<8x128xf32> to vector<128xf32>
    %85 = vector.shape_cast %84 : vector<128xf32> to vector<1x128xf32>
    %c0_34 = arith.constant 0 : index
    %c0_35 = arith.constant 0 : index
    %c0_36 = arith.constant 0 : index
    %86 = vector.load %arg11[%c0_34, %c0_35, %c0_36] : memref<1x1x128xf32, #tpu.memory_space<vmem>>, vector<1x1x128xf32>
    %87 = vector.shape_cast %86 : vector<1x1x128xf32> to vector<1x128xf32>
    %88 = vector.shape_cast %85 : vector<1x128xf32> to vector<1x1x128xf32>
    tpu.vector_store %arg11[%c0_34, %c0_35, %c0_36], %88 {strides = array<i32>} : memref<1x1x128xf32, #tpu.memory_space<vmem>>, vector<1x1x128xf32>,
    return
  }
  func.func @transform_0(%arg0: i32) -> (i32, i32) {
    %c0_i32 = arith.constant 0 : i32
    %c0_i32_0 = arith.constant 0 : i32
    return %arg0, %c0_i32 : i32, i32
  }
  func.func @transform_1(%arg0: i32) -> (i32, i32) {
    %c0_i32 = arith.constant 0 : i32
    %c0_i32_0 = arith.constant 0 : i32
    return %arg0, %c0_i32 : i32, i32
  }
  func.func @transform_2(%arg0: i32) -> (i32, i32) {
    %c0_i32 = arith.constant 0 : i32
    %c0_i32_0 = arith.constant 0 : i32
    %c0_i32_1 = arith.constant 0 : i32
    return %c0_i32, %c0_i32_0 : i32, i32
  }
  func.func @transform_3(%arg0: i32) -> (i32, i32) {
    %c0_i32 = arith.constant 0 : i32
    %c0_i32_0 = arith.constant 0 : i32
    %c0_i32_1 = arith.constant 0 : i32
    return %c0_i32, %c0_i32_0 : i32, i32
  }
  func.func @transform_4(%arg0: i32) -> (i32, i32) {
    %c0_i32 = arith.constant 0 : i32
    %c0_i32_0 = arith.constant 0 : i32
    %c0_i32_1 = arith.constant 0 : i32
    return %c0_i32, %c0_i32_0 : i32, i32
  }
  func.func @transform_5(%arg0: i32) -> (i32, i32) {
    %c0_i32 = arith.constant 0 : i32
    %c0_i32_0 = arith.constant 0 : i32
    %c0_i32_1 = arith.constant 0 : i32
    return %c0_i32, %c0_i32_0 : i32, i32
  }
  func.func @transform_6(%arg0: i32) -> (i32, i32) {
    %c0_i32 = arith.constant 0 : i32
    %c0_i32_0 = arith.constant 0 : i32
    %c0_i32_1 = arith.constant 0 : i32
    return %c0_i32, %c0_i32_0 : i32, i32
  }
  func.func @transform_7(%arg0: i32) -> (i32, i32) {
    %c0_i32 = arith.constant 0 : i32
    %c0_i32_0 = arith.constant 0 : i32
    %c0_i32_1 = arith.constant 0 : i32
    return %c0_i32, %c0_i32_0 : i32, i32
  }
  func.func @transform_8(%arg0: i32) -> (i32, i32) {
    %c0_i32 = arith.constant 0 : i32
    %c0_i32_0 = arith.constant 0 : i32
    %c0_i32_1 = arith.constant 0 : i32
    return %c0_i32, %c0_i32_0 : i32, i32
  }
  func.func @transform_9(%arg0: i32) -> (i32, i32) {
    %c0_i32 = arith.constant 0 : i32
    %c0_i32_0 = arith.constant 0 : i32
    return %arg0, %c0_i32 : i32, i32
  }
  func.func @transform_10(%arg0: i32) -> (i32, i32, i32) {
    %c0_i32 = arith.constant 0 : i32
    %c0_i32_0 = arith.constant 0 : i32
    %c0_i32_1 = arith.constant 0 : i32
    return %arg0, %c0_i32, %c0_i32_0 : i32, i32, i32
  }
}

</mosaic_0001>

<llo_original>
// kernel: tpu_custom_call.1
$region0: #{tpu_custom_call.1}
  #allocation0 [shape = 'u32[]', space=smem, size = 0x4, offset = 0x4, fixed_abs, tag = 'smem constant byte address 0x4 - core index']
  #allocation1 [shape = 'u32[144,128]{1,0:T(1,128)}', space=vmem, size = 0x12000, scoped, tag = 'internal scratch']
  %s0 = inlined_call_operand.hbm [shape: f32[12,256], index: 0, kind: input, shape index: {}]
  %s1 = inlined_call_operand.hbm [shape: f32[12,256], index: 1, kind: input, shape index: {}]
  %s2 = inlined_call_operand.hbm [shape: bf16[256,128], index: 2, kind: input, shape index: {}]
  %s3 = inlined_call_operand.hbm [shape: bf16[256,128], index: 3, kind: input, shape index: {}]
  %s4 = inlined_call_operand.vmem [shape: f32[1,128], index: 4, kind: input, shape index: {}]
  %s5 = inlined_call_operand.hbm [shape: f32[128,128], index: 5, kind: input, shape index: {}]
  %s6 = inlined_call_operand.vmem [shape: f32[1,128], index: 6, kind: input, shape index: {}]
  %s7 = inlined_call_operand.vmem [shape: f32[1,128], index: 7, kind: input, shape index: {}]
  %s8 = inlined_call_operand.vmem [shape: f32[4,128], index: 8, kind: input, shape index: {}]
  %s9 = inlined_call_operand.vmem [shape: f32[12,8], index: 9, kind: output, shape index: {0}]
  %s10 = inlined_call_operand.hbm [shape: f32[2,1,128], index: 10, kind: output, shape index: {1}]
  %11 = xla_tuple %s9, %s10
  %s12 = sld [smem:[#allocation0]]
  $region97: #{tpu_custom_call.1} parent=0
    _
  %s14 = ssub.s32 1, %s12
  %s15 = scalar_select 0, %s14, %s12
  $region1: #{tpu_custom_call.1} parent=0
    #allocation2 [shape = 'u8[16384]{0}', space=vmem, size = 0x4000, scoped, tag = 'input window, operand 0']
    #allocation3 [shape = 's32[2]{0}', space=sflag, size = 0x8, scoped, tag = 'scoped memory for tpu_custom_call.1']
    #allocation4 [shape = 's32[2]{0}', space=sflag, size = 0x8, scoped, tag = 'scoped memory for tpu_custom_call.1']
    #allocation5 [shape = 'u8[16384]{0}', space=vmem, size = 0x4000, scoped, tag = 'input window, operand 1']
    #allocation6 [shape = 's32[2]{0}', space=sflag, size = 0x8, scoped, tag = 'scoped memory for tpu_custom_call.1']
    #allocation7 [shape = 'u8[65536]{0}', space=vmem, size = 0x10000, scoped, tag = 'input window, operand 2, single buffered']
    #allocation8 [shape = 'u8[65536]{0}', space=vmem, size = 0x10000, scoped, tag = 'input window, operand 3, single buffered']
    #allocation9 [shape = 's32[1]{0}', space=sflag, size = 0x4, scoped, tag = 'scoped memory for tpu_custom_call.1']
    #allocation10 [shape = 'u8[65536]{0}', space=vmem, size = 0x10000, scoped, tag = 'input window, operand 5, single buffered']
    #allocation11 [shape = 'u8[1024]{0}', space=vmem, size = 0x400, scoped, tag = 'output window, operand 1']
    %16 = vsyncpa [#allocation3], 0
    %s17 = scalar_lea.sflag [#allocation3], 1
    %18 = vsyncpa %s17, 0
    %19 = vsyncpa [#allocation6], 0
    %s20 = scalar_lea.sflag [#allocation6], 1
    %21 = vsyncpa %s20, 0
    %22 = vsyncpa [#allocation9], 0
    %23 = vsyncpa [#allocation4], 0
    %s24 = scalar_lea.sflag [#allocation4], 1
    %25 = vsyncpa %s24, 0
    loop: start=0, step=1, limit=4
    $region2: #{tpu_custom_call.1} parent=1 // loop_pre_header
      _
    $region3: #{tpu_custom_call.1} parent=1 // loop_header
      %s27 = sphi 0, %s31
      %p28 = scmp.ge.s32.totalorder %s27, 4
      %s37 = sphi 0, %s39
      %s40 = sphi 0, %s37
      %s41 = sphi 0, %s40
      %s57 = sphi 0, %s41
      %s63 = sphi 0, %s65
      %s66 = sphi 0, %s63
      %s67 = sphi 0, %s66
      %s83 = sphi 0, %s67
      %s87 = sphi 0, %s87
      %s89 = sphi 0, %s87
      %s90 = sphi 0, %s89
      %s104 = sphi 0, %s90
      %s108 = sphi 0, %s108
      %s110 = sphi 0, %s108
      %s111 = sphi 0, %s110
      %s125 = sphi 0, %s111
      %s129 = sphi 0, %s129
      %s131 = sphi 0, %s129
      %s132 = sphi 0, %s131
      %s146 = sphi 0, %s132
      %s150 = sphi 0, %s150
      %s152 = sphi 0, %s150
      %s153 = sphi 0, %s152
      %s167 = sphi 0, %s153
      %s171 = sphi 0, %s171
      %s173 = sphi 0, %s171
      %s174 = sphi 0, %s173
      %s188 = sphi 0, %s174
      %s192 = sphi 0, %s192
      %s194 = sphi 0, %s192
      %s195 = sphi 0, %s194
      %s209 = sphi 0, %s195
      %s213 = sphi 0, %s213
      %s215 = sphi 0, %s213
      %s216 = sphi 0, %s215
      %s230 = sphi 0, %s216
      %s236 = sphi 0, %s238
      %s239 = sphi 0, %s236
      %s240 = sphi 0, %s239
      %s256 = sphi 0, %s240
      %s262 = sphi 0, %s264
      %s265 = sphi 0, %s262
      %s266 = sphi 0, %s265
      %s282 = sphi 0, %s266
    $region4: #{tpu_custom_call.1} parent=1 // loop_header_branch
      %30 = sbr.rel (%p28) target = $region8
    $region5: #{tpu_custom_call.1} parent=1 // loop_body
      %s32 = ssub.s32 %s27, 1
      %s33 = ssub.s32 %s27, 2
      %s34 = sadd.s32 %s27, 1
      %s35 = ssub.s32 %s27, %s34
      %p36 = scmp.eq.s32.totalorder %s35, 0
      %s38 = sadd.s32 %s37, 1
      %s39 = scalar_select %p36, %s37, %s38
      %p42 = pneg %p36
      %p43 = scmp.eq.s32.totalorder %s27, 1
      %p44 = por %p42, %p43
      %p45 = scmp.ne.s32.totalorder %s37, %s40
      %p46 = scmp.eq.s32.totalorder %s27, 0
      %p47 = por %p45, %p46
      %p48 = scmp.ne.s32.totalorder %s37, %s40
      %p49 = scmp.eq.s32.totalorder %s32, 1
      %p50 = por %p48, %p49
      %p51 = scmp.ne.s32.totalorder %s40, %s41
      %p52 = scmp.eq.s32.totalorder %s32, 0
      %p53 = por %p51, %p52
      %p54 = scmp.ne.s32.totalorder %s40, %s41
      %p55 = scmp.eq.s32.totalorder %s33, 1
      %p56 = por %p54, %p55
      %p58 = scmp.ne.s32.totalorder %s41, %s57
      %p59 = scmp.eq.s32.totalorder %s33, 0
      %p60 = por %p58, %p59
      %s61 = ssub.s32 %s27, %s34
      %p62 = scmp.eq.s32.totalorder %s61, 0
      %s64 = sadd.s32 %s63, 1
      %s65 = scalar_select %p62, %s63, %s64
      %p68 = pneg %p62
      %p69 = scmp.eq.s32.totalorder %s27, 1
      %p70 = por %p68, %p69
      %p71 = scmp.ne.s32.totalorder %s63, %s66
      %p72 = scmp.eq.s32.totalorder %s27, 0
      %p73 = por %p71, %p72
      %p74 = scmp.ne.s32.totalorder %s63, %s66
      %p75 = scmp.eq.s32.totalorder %s32, 1
      %p76 = por %p74, %p75
      %p77 = scmp.ne.s32.totalorder %s66, %s67
      %p78 = scmp.eq.s32.totalorder %s32, 0
      %p79 = por %p77, %p78
      %p80 = scmp.ne.s32.totalorder %s66, %s67
      %p81 = scmp.eq.s32.totalorder %s33, 1
      %p82 = por %p80, %p81
      %p84 = scmp.ne.s32.totalorder %s67, %s83
      %p85 = scmp.eq.s32.totalorder %s33, 0
      %p86 = por %p84, %p85
      %s88 = sadd.s32 %s87, 1
      %p91 = scmp.eq.s32.totalorder %s27, 1
      %p92 = scmp.ne.s32.totalorder %s87, %s89
      %p93 = scmp.eq.s32.totalorder %s27, 0
      %p94 = por %p92, %p93
      %p95 = scmp.ne.s32.totalorder %s87, %s89
      %p96 = scmp.eq.s32.totalorder %s32, 1
      %p97 = por %p95, %p96
      %p98 = scmp.ne.s32.totalorder %s89, %s90
      %p99 = scmp.eq.s32.totalorder %s32, 0
      %p100 = por %p98, %p99
      %p101 = scmp.ne.s32.totalorder %s89, %s90
      %p102 = scmp.eq.s32.totalorder %s33, 1
      %p103 = por %p101, %p102
      %p105 = scmp.ne.s32.totalorder %s90, %s104
      %p106 = scmp.eq.s32.totalorder %s33, 0
      %p107 = por %p105, %p106
      %s109 = sadd.s32 %s108, 1
      %p112 = scmp.eq.s32.totalorder %s27, 1
      %p113 = scmp.ne.s32.totalorder %s108, %s110
      %p114 = scmp.eq.s32.totalorder %s27, 0
      %p115 = por %p113, %p114
      %p116 = scmp.ne.s32.totalorder %s108, %s110
      %p117 = scmp.eq.s32.totalorder %s32, 1
      %p118 = por %p116, %p117
      %p119 = scmp.ne.s32.totalorder %s110, %s111
      %p120 = scmp.eq.s32.totalorder %s32, 0
      %p121 = por %p119, %p120
      %p122 = scmp.ne.s32.totalorder %s110, %s111
      %p123 = scmp.eq.s32.totalorder %s33, 1
      %p124 = por %p122, %p123
      %p126 = scmp.ne.s32.totalorder %s111, %s125
      %p127 = scmp.eq.s32.totalorder %s33, 0
      %p128 = por %p126, %p127
      %s130 = sadd.s32 %s129, 1
      %p133 = scmp.eq.s32.totalorder %s27, 1
      %p134 = scmp.ne.s32.totalorder %s129, %s131
      %p135 = scmp.eq.s32.totalorder %s27, 0
      %p136 = por %p134, %p135
      %p137 = scmp.ne.s32.totalorder %s129, %s131
      %p138 = scmp.eq.s32.totalorder %s32, 1
      %p139 = por %p137, %p138
      %p140 = scmp.ne.s32.totalorder %s131, %s132
      %p141 = scmp.eq.s32.totalorder %s32, 0
      %p142 = por %p140, %p141
      %p143 = scmp.ne.s32.totalorder %s131, %s132
      %p144 = scmp.eq.s32.totalorder %s33, 1
      %p145 = por %p143, %p144
      %p147 = scmp.ne.s32.totalorder %s132, %s146
      %p148 = scmp.eq.s32.totalorder %s33, 0
      %p149 = por %p147, %p148
      %s151 = sadd.s32 %s150, 1
      %p154 = scmp.eq.s32.totalorder %s27, 1
      %p155 = scmp.ne.s32.totalorder %s150, %s152
      %p156 = scmp.eq.s32.totalorder %s27, 0
      %p157 = por %p155, %p156
      %p158 = scmp.ne.s32.totalorder %s150, %s152
      %p159 = scmp.eq.s32.totalorder %s32, 1
      %p160 = por %p158, %p159
      %p161 = scmp.ne.s32.totalorder %s152, %s153
      %p162 = scmp.eq.s32.totalorder %s32, 0
      %p163 = por %p161, %p162
      %p164 = scmp.ne.s32.totalorder %s152, %s153
      %p165 = scmp.eq.s32.totalorder %s33, 1
      %p166 = por %p164, %p165
      %p168 = scmp.ne.s32.totalorder %s153, %s167
      %p169 = scmp.eq.s32.totalorder %s33, 0
      %p170 = por %p168, %p169
      %s172 = sadd.s32 %s171, 1
      %p175 = scmp.eq.s32.totalorder %s27, 1
      %p176 = scmp.ne.s32.totalorder %s171, %s173
      %p177 = scmp.eq.s32.totalorder %s27, 0
      %p178 = por %p176, %p177
      %p179 = scmp.ne.s32.totalorder %s171, %s173
      %p180 = scmp.eq.s32.totalorder %s32, 1
      %p181 = por %p179, %p180
      %p182 = scmp.ne.s32.totalorder %s173, %s174
      %p183 = scmp.eq.s32.totalorder %s32, 0
      %p184 = por %p182, %p183
      %p185 = scmp.ne.s32.totalorder %s173, %s174
      %p186 = scmp.eq.s32.totalorder %s33, 1
      %p187 = por %p185, %p186
      %p189 = scmp.ne.s32.totalorder %s174, %s188
      %p190 = scmp.eq.s32.totalorder %s33, 0
      %p191 = por %p189, %p190
      %s193 = sadd.s32 %s192, 1
      %p196 = scmp.eq.s32.totalorder %s27, 1
      %p197 = scmp.ne.s32.totalorder %s192, %s194
      %p198 = scmp.eq.s32.totalorder %s27, 0
      %p199 = por %p197, %p198
      %p200 = scmp.ne.s32.totalorder %s192, %s194
      %p201 = scmp.eq.s32.totalorder %s32, 1
      %p202 = por %p200, %p201
      %p203 = scmp.ne.s32.totalorder %s194, %s195
      %p204 = scmp.eq.s32.totalorder %s32, 0
      %p205 = por %p203, %p204
      %p206 = scmp.ne.s32.totalorder %s194, %s195
      %p207 = scmp.eq.s32.totalorder %s33, 1
      %p208 = por %p206, %p207
      %p210 = scmp.ne.s32.totalorder %s195, %s209
      %p211 = scmp.eq.s32.totalorder %s33, 0
      %p212 = por %p210, %p211
      %s214 = sadd.s32 %s213, 1
      %p217 = scmp.eq.s32.totalorder %s27, 1
      %p218 = scmp.ne.s32.totalorder %s213, %s215
      %p219 = scmp.eq.s32.totalorder %s27, 0
      %p220 = por %p218, %p219
      %p221 = scmp.ne.s32.totalorder %s213, %s215
      %p222 = scmp.eq.s32.totalorder %s32, 1
      %p223 = por %p221, %p222
      %p224 = scmp.ne.s32.totalorder %s215, %s216
      %p225 = scmp.eq.s32.totalorder %s32, 0
      %p226 = por %p224, %p225
      %p227 = scmp.ne.s32.totalorder %s215, %s216
      %p228 = scmp.eq.s32.totalorder %s33, 1
      %p229 = por %p227, %p228
      %p231 = scmp.ne.s32.totalorder %s216, %s230
      %p232 = scmp.eq.s32.totalorder %s33, 0
      %p233 = por %p231, %p232
      %s234 = ssub.s32 %s27, %s34
      %p235 = scmp.eq.s32.totalorder %s234, 0
      %s237 = sadd.s32 %s236, 1
      %s238 = scalar_select %p235, %s236, %s237
      %p241 = pneg %p235
      %p242 = scmp.eq.s32.totalorder %s27, 1
      %p243 = por %p241, %p242
      %p244 = scmp.ne.s32.totalorder %s236, %s239
      %p245 = scmp.eq.s32.totalorder %s27, 0
      %p246 = por %p244, %p245
      %p247 = scmp.ne.s32.totalorder %s236, %s239
      %p248 = scmp.eq.s32.totalorder %s32, 1
      %p249 = por %p247, %p248
      %p250 = scmp.ne.s32.totalorder %s239, %s240
      %p251 = scmp.eq.s32.totalorder %s32, 0
      %p252 = por %p250, %p251
      %p253 = scmp.ne.s32.totalorder %s239, %s240
      %p254 = scmp.eq.s32.totalorder %s33, 1
      %p255 = por %p253, %p254
      %p257 = scmp.ne.s32.totalorder %s240, %s256
      %p258 = scmp.eq.s32.totalorder %s33, 0
      %p259 = por %p257, %p258
      %s260 = ssub.s32 %s27, %s34
      %p261 = scmp.eq.s32.totalorder %s260, 0
      %s263 = sadd.s32 %s262, 1
      %s264 = scalar_select %p261, %s262, %s263
      %p267 = pneg %p261
      %p268 = scmp.eq.s32.totalorder %s27, 1
      %p269 = por %p267, %p268
      %p270 = scmp.ne.s32.totalorder %s262, %s265
      %p271 = scmp.eq.s32.totalorder %s27, 0
      %p272 = por %p270, %p271
      %p273 = scmp.ne.s32.totalorder %s262, %s265
      %p274 = scmp.eq.s32.totalorder %s32, 1
      %p275 = por %p273, %p274
      %p276 = scmp.ne.s32.totalorder %s265, %s266
      %p277 = scmp.eq.s32.totalorder %s32, 0
      %p278 = por %p276, %p277
      %p279 = scmp.ne.s32.totalorder %s265, %s266
      %p280 = scmp.eq.s32.totalorder %s33, 1
      %p281 = por %p279, %p280
      %p283 = scmp.ne.s32.totalorder %s266, %s282
      %p284 = scmp.eq.s32.totalorder %s33, 0
      %p285 = por %p283, %p284
      %p286 = scmp.le.s32.totalorder 1, %s27
      %p287 = scmp.lt.s32.totalorder %s27, 3
      %p288 = pnand %p286, %p287
      %p289 = pneg %p288
      // Predicated region
      $region9: #{tpu_custom_call.1} parent=5 // pred_check
        _
      $region10: #{tpu_custom_call.1} parent=5 // pred_check_branch
        %291 = sbr.rel (%p288) target = $region12
      $region11: #{tpu_custom_call.1} parent=5 // pred_region
        %s292 = ssub.s32 %s27, 1
        // Predicated region
        $region13: #{tpu_custom_call.1} parent=11 // pred_check
          %p293 = pneg %p100
        $region14: #{tpu_custom_call.1} parent=11 // pred_check_branch
          %295 = sbr.rel (%p293) target = $region16
        $region15: #{tpu_custom_call.1} parent=11 // pred_region
          %s297 = ssub.s32 2048, 2048
          %298 = vsyncadd [#allocation6], %s297
          %s299 = sshll.u32 [#allocation7], 4
          %s300 = int_to_ptr.vmem [resolvable:$true] %s299
          %305 = dma.hbm_to_vmem [thread:$0]  %s2, 2048, %s300, [#allocation6], 64, 64, 4
        $region16: #{tpu_custom_call.1} parent=11 // pred_fallthru
          _
        // Predicated region
        $region17: #{tpu_custom_call.1} parent=11 // pred_check
          %p306 = pneg %p121
        $region18: #{tpu_custom_call.1} parent=11 // pred_check_branch
          %308 = sbr.rel (%p306) target = $region20
        $region19: #{tpu_custom_call.1} parent=11 // pred_region
          %s310 = ssub.s32 2048, 2048
          %311 = vsyncadd [#allocation9], %s310
          %s312 = sshll.u32 [#allocation8], 4
          %s313 = int_to_ptr.vmem [resolvable:$true] %s312
          %318 = dma.hbm_to_vmem [thread:$0]  %s3, 2048, %s313, [#allocation9], 64, 64, 4
        $region20: #{tpu_custom_call.1} parent=11 // pred_fallthru
          _
        // Predicated region
        $region21: #{tpu_custom_call.1} parent=11 // pred_check
          %p319 = pneg %p142
        $region22: #{tpu_custom_call.1} parent=11 // pred_check_branch
          %321 = sbr.rel (%p319) target = $region24
        $region23: #{tpu_custom_call.1} parent=11 // pred_region
          _
        $region24: #{tpu_custom_call.1} parent=11 // pred_fallthru
          _
        // Predicated region
        $region25: #{tpu_custom_call.1} parent=11 // pred_check
          %p322 = pneg %p163
        $region26: #{tpu_custom_call.1} parent=11 // pred_check_branch
          %324 = sbr.rel (%p322) target = $region28
        $region27: #{tpu_custom_call.1} parent=11 // pred_region
          %s326 = ssub.s32 2048, 2048
          %327 = vsyncadd [#allocation9], %s326
          %s328 = sshll.u32 [#allocation10], 4
          %s329 = int_to_ptr.vmem [resolvable:$true] %s328
          %334 = dma.hbm_to_vmem [thread:$0]  %s5, 2048, %s329, [#allocation9], 128, 128, 8
        $region28: #{tpu_custom_call.1} parent=11 // pred_fallthru
          _
        // Predicated region
        $region29: #{tpu_custom_call.1} parent=11 // pred_check
          %p335 = pneg %p184
        $region30: #{tpu_custom_call.1} parent=11 // pred_check_branch
          %337 = sbr.rel (%p335) target = $region32
        $region31: #{tpu_custom_call.1} parent=11 // pred_region
          _
        $region32: #{tpu_custom_call.1} parent=11 // pred_fallthru
          _
        // Predicated region
        $region33: #{tpu_custom_call.1} parent=11 // pred_check
          %p338 = pneg %p205
        $region34: #{tpu_custom_call.1} parent=11 // pred_check_branch
          %340 = sbr.rel (%p338) target = $region36
        $region35: #{tpu_custom_call.1} parent=11 // pred_region
          _
        $region36: #{tpu_custom_call.1} parent=11 // pred_fallthru
          _
        // Predicated region
        $region37: #{tpu_custom_call.1} parent=11 // pred_check
          %p341 = pneg %p226
        $region38: #{tpu_custom_call.1} parent=11 // pred_check_branch
          %343 = sbr.rel (%p341) target = $region40
        $region39: #{tpu_custom_call.1} parent=11 // pred_region
          _
        $region40: #{tpu_custom_call.1} parent=11 // pred_fallthru
          _
      $region12: #{tpu_custom_call.1} parent=5 // pred_fallthru
        _
      %p344 = scmp.lt.s32.totalorder %s27, 2
      // Predicated region
      $region41: #{tpu_custom_call.1} parent=5 // pred_check
        %p345 = pneg %p344
      $region42: #{tpu_custom_call.1} parent=5 // pred_check_branch
        %347 = sbr.rel (%p345) target = $region44
      $region43: #{tpu_custom_call.1} parent=5 // pred_region
        // Predicated region
        $region45: #{tpu_custom_call.1} parent=43 // pred_check
          %p348 = pneg %p47
        $region46: #{tpu_custom_call.1} parent=43 // pred_check_branch
          %350 = sbr.rel (%p348) target = $region48
        $region47: #{tpu_custom_call.1} parent=43 // pred_region
          %s351 = sand.u32 %s37, 1
          %s352 = scalar_lea.sflag [#allocation3], %s351
          %s353 = sand.u32 %s37, 1
          %s354 = smul.addr %s353, 16
          %s355 = scalar_lea.vmem [#allocation2], %s354
          %s357 = ssub.s32 256, 256
          %358 = vsyncadd %s352, %s357
          %s359 = smul.addr %s27, 2
          %s360 = smul.addr %s359, 128
          %s361 = scalar_lea.hbm %s0, %s360
          %s363 = sshll.u32 %s355, 4
          %s364 = int_to_ptr.vmem [resolvable:$true] %s363
          %366 = dma.hbm_to_vmem [thread:$0]  %s361, 256, %s364, %s352
        $region48: #{tpu_custom_call.1} parent=43 // pred_fallthru
          _
        // Predicated region
        $region49: #{tpu_custom_call.1} parent=43 // pred_check
          %p367 = pneg %p73
        $region50: #{tpu_custom_call.1} parent=43 // pred_check_branch
          %369 = sbr.rel (%p367) target = $region52
        $region51: #{tpu_custom_call.1} parent=43 // pred_region
          %s370 = sand.u32 %s27, 1
          %s371 = scalar_lea.sflag [#allocation6], %s370
          %s372 = sand.u32 %s63, 1
          %s373 = smul.addr %s372, 16
          %s374 = scalar_lea.vmem [#allocation5], %s373
          %s376 = ssub.s32 256, 256
          %377 = vsyncadd %s371, %s376
          %s378 = smul.addr %s27, 2
          %s379 = smul.addr %s378, 128
          %s380 = scalar_lea.hbm %s1, %s379
          %s382 = sshll.u32 %s374, 4
          %s383 = int_to_ptr.vmem [resolvable:$true] %s382
          %385 = dma.hbm_to_vmem [thread:$0]  %s380, 256, %s383, %s371
        $region52: #{tpu_custom_call.1} parent=43 // pred_fallthru
          _
      $region44: #{tpu_custom_call.1} parent=5 // pred_fallthru
        _
      %p386 = scmp.le.s32.totalorder 1, %s27
      %p387 = scmp.lt.s32.totalorder %s27, 3
      %p388 = pnand %p386, %p387
      %p389 = pneg %p388
      // Predicated region
      $region53: #{tpu_custom_call.1} parent=5 // pred_check
        _
      $region54: #{tpu_custom_call.1} parent=5 // pred_check_branch
        %391 = sbr.rel (%p388) target = $region56
      $region55: #{tpu_custom_call.1} parent=5 // pred_region
        %s392 = ssub.s32 %s27, 1
        %s393 = sand.u32 %s40, 1
        %s394 = scalar_lea.sflag [#allocation3], %s393
        %s395 = sand.u32 %s40, 1
        %s396 = smul.addr %s395, 16
        %s397 = scalar_lea.vmem [#allocation2], %s396
        // Predicated region
        $region57: #{tpu_custom_call.1} parent=55 // pred_check
          %p398 = pneg %p53
        $region58: #{tpu_custom_call.1} parent=55 // pred_check_branch
          %400 = sbr.rel (%p398) target = $region60
        $region59: #{tpu_custom_call.1} parent=55 // pred_region
          %401 = dma.done %s394, 256
        $region60: #{tpu_custom_call.1} parent=55 // pred_fallthru
          _
        %s402 = sand.u32 %s32, 1
        %s403 = scalar_lea.sflag [#allocation6], %s402
        %s404 = sand.u32 %s66, 1
        %s405 = smul.addr %s404, 16
        %s406 = scalar_lea.vmem [#allocation5], %s405
        // Predicated region
        $region61: #{tpu_custom_call.1} parent=55 // pred_check
          %p407 = pneg %p79
        $region62: #{tpu_custom_call.1} parent=55 // pred_check_branch
          %409 = sbr.rel (%p407) target = $region64
        $region63: #{tpu_custom_call.1} parent=55 // pred_region
          %410 = dma.done %s403, 256
        $region64: #{tpu_custom_call.1} parent=55 // pred_fallthru
          _
        // Predicated region
        $region65: #{tpu_custom_call.1} parent=55 // pred_check
          %p411 = pneg %p100
        $region66: #{tpu_custom_call.1} parent=55 // pred_check_branch
          %413 = sbr.rel (%p411) target = $region68
        $region67: #{tpu_custom_call.1} parent=55 // pred_region
          %414 = dma.done [#allocation6], 2048
        $region68: #{tpu_custom_call.1} parent=55 // pred_fallthru
          _
        // Predicated region
        $region69: #{tpu_custom_call.1} parent=55 // pred_check
          %p415 = pneg %p121
        $region70: #{tpu_custom_call.1} parent=55 // pred_check_branch
          %417 = sbr.rel (%p415) target = $region72
        $region71: #{tpu_custom_call.1} parent=55 // pred_region
          %418 = dma.done [#allocation9], 2048
        $region72: #{tpu_custom_call.1} parent=55 // pred_fallthru
          _
        // Predicated region
        $region73: #{tpu_custom_call.1} parent=55 // pred_check
          %p419 = pneg %p163
        $region74: #{tpu_custom_call.1} parent=55 // pred_check_branch
          %421 = sbr.rel (%p419) target = $region76
        $region75: #{tpu_custom_call.1} parent=55 // pred_region
          %422 = dma.done [#allocation9], 2048
        $region76: #{tpu_custom_call.1} parent=55 // pred_fallthru
          _
        %s423 = sand.u32 %s40, 1
        %s424 = scalar_lea.sflag [#allocation3], %s423
        %s425 = sand.u32 %s40, 1
        %s426 = smul.addr %s425, 16
        %s427 = scalar_lea.vmem [#allocation2], %s426
        %p428 = pneg %p53
        %p429 = pneg %p50
        %s430 = sand.u32 %s32, 1
        %s431 = scalar_lea.sflag [#allocation6], %s430
        %s432 = sand.u32 %s66, 1
        %s433 = smul.addr %s432, 16
        %s434 = scalar_lea.vmem [#allocation5], %s433
        %p435 = pneg %p79
        %p436 = pneg %p76
        %p437 = pneg %p100
        %p438 = pneg %p97
        %p439 = pneg %p121
        %p440 = pneg %p118
        %p441 = pneg %p142
        %p442 = pneg %p139
        %p443 = pneg %p163
        %p444 = pneg %p160
        %p445 = pneg %p184
        %p446 = pneg %p181
        %p447 = pneg %p205
        %p448 = pneg %p202
        %p449 = pneg %p226
        %p450 = pneg %p223
        %p451 = pneg %p252
        %p452 = pneg %p249
        %p453 = scmp.lt.s32.totalorder %s32, 1
        %s454 = scalar_select %p453, %s32, 1
        %s455 = smul.addr %s454, 8
        %s456 = scalar_lea.vmem %s9, %s455
        %p457 = pneg %p278
        %p458 = pneg %p275
        %s459 = sand.u32 %s265, 1
        %s460 = scalar_lea.sflag [#allocation4], %s459
        %s461 = sand.u32 %s265, 1
        %s462 = scalar_lea.vmem [#allocation11], %s461
        %p463 = scmp.lt.s32.totalorder %s32, 1
        %s464 = scalar_select %p463, %s32, 1
        %s465 = smul.addr %s464, 8
        %s466 = scalar_lea.vmem %s9, %s465
        %v468 = vld [vmem:[%s397] sm:$0xff]
        %v469 = vld [vmem:[%s397 + $0x8] sm:$0xff]
        %v470 = vpack.c.bf16 %v468, %v468
        %v471 = vpack.c.bf16 %v469, %v469
        %v472 = vld [vmem:[%s406] sm:$0xff]
        %v473 = vld [vmem:[%s406 + $0x8] sm:$0xff]
        %v474 = vpack.c.bf16 %v472, %v472
        %v475 = vpack.c.bf16 %v473, %v473
        %v476 = vld [vmem:[#allocation7] sm:$0xf]
        %v477 = vld [vmem:[#allocation7 + $0x4] sm:$0xf]
        %v478 = vld [vmem:[#allocation7 + $0x8] sm:$0xf]
        %v479 = vld [vmem:[#allocation7 + $0xc] sm:$0xf]
        %v480 = vld [vmem:[#allocation7 + $0x10] sm:$0xf]
        %v481 = vld [vmem:[#allocation7 + $0x14] sm:$0xf]
        %v482 = vld [vmem:[#allocation7 + $0x18] sm:$0xf]
        %v483 = vld [vmem:[#allocation7 + $0x1c] sm:$0xf]
        %v484 = vld [vmem:[#allocation7 + $0x20] sm:$0xf]
        %v485 = vld [vmem:[#allocation7 + $0x24] sm:$0xf]
        %v486 = vld [vmem:[#allocation7 + $0x28] sm:$0xf]
        %v487 = vld [vmem:[#allocation7 + $0x2c] sm:$0xf]
        %v488 = vld [vmem:[#allocation7 + $0x30] sm:$0xf]
        %v489 = vld [vmem:[#allocation7 + $0x34] sm:$0xf]
        %v490 = vld [vmem:[#allocation7 + $0x38] sm:$0xf]
        %v491 = vld [vmem:[#allocation7 + $0x3c] sm:$0xf]
        %v492 = vld [vmem:[#allocation7 + $0x40] sm:$0xf]
        %v493 = vld [vmem:[#allocation7 + $0x44] sm:$0xf]
        %v494 = vld [vmem:[#allocation7 + $0x48] sm:$0xf]
        %v495 = vld [vmem:[#allocation7 + $0x4c] sm:$0xf]
        %v496 = vld [vmem:[#allocation7 + $0x50] sm:$0xf]
        %v497 = vld [vmem:[#allocation7 + $0x54] sm:$0xf]
        %v498 = vld [vmem:[#allocation7 + $0x58] sm:$0xf]
        %v499 = vld [vmem:[#allocation7 + $0x5c] sm:$0xf]
        %v500 = vld [vmem:[#allocation7 + $0x60] sm:$0xf]
        %v501 = vld [vmem:[#allocation7 + $0x64] sm:$0xf]
        %v502 = vld [vmem:[#allocation7 + $0x68] sm:$0xf]
        %v503 = vld [vmem:[#allocation7 + $0x6c] sm:$0xf]
        %v504 = vld [vmem:[#allocation7 + $0x70] sm:$0xf]
        %v505 = vld [vmem:[#allocation7 + $0x74] sm:$0xf]
        %v506 = vld [vmem:[#allocation7 + $0x78] sm:$0xf]
        %v507 = vld [vmem:[#allocation7 + $0x7c] sm:$0xf]
        %v508 = vld [vmem:[#allocation8] sm:$0xf]
        %v509 = vld [vmem:[#allocation8 + $0x4] sm:$0xf]
        %v510 = vld [vmem:[#allocation8 + $0x8] sm:$0xf]
        %v511 = vld [vmem:[#allocation8 + $0xc] sm:$0xf]
        %v512 = vld [vmem:[#allocation8 + $0x10] sm:$0xf]
        %v513 = vld [vmem:[#allocation8 + $0x14] sm:$0xf]
        %v514 = vld [vmem:[#allocation8 + $0x18] sm:$0xf]
        %v515 = vld [vmem:[#allocation8 + $0x1c] sm:$0xf]
        %v516 = vld [vmem:[#allocation8 + $0x20] sm:$0xf]
        %v517 = vld [vmem:[#allocation8 + $0x24] sm:$0xf]
        %v518 = vld [vmem:[#allocation8 + $0x28] sm:$0xf]
        %v519 = vld [vmem:[#allocation8 + $0x2c] sm:$0xf]
        %v520 = vld [vmem:[#allocation8 + $0x30] sm:$0xf]
        %v521 = vld [vmem:[#allocation8 + $0x34] sm:$0xf]
        %v522 = vld [vmem:[#allocation8 + $0x38] sm:$0xf]
        %v523 = vld [vmem:[#allocation8 + $0x3c] sm:$0xf]
        %v524 = vld [vmem:[#allocation8 + $0x40] sm:$0xf]
        %v525 = vld [vmem:[#allocation8 + $0x44] sm:$0xf]
        %v526 = vld [vmem:[#allocation8 + $0x48] sm:$0xf]
        %v527 = vld [vmem:[#allocation8 + $0x4c] sm:$0xf]
        %v528 = vld [vmem:[#allocation8 + $0x50] sm:$0xf]
        %v529 = vld [vmem:[#allocation8 + $0x54] sm:$0xf]
        %v530 = vld [vmem:[#allocation8 + $0x58] sm:$0xf]
        %v531 = vld [vmem:[#allocation8 + $0x5c] sm:$0xf]
        %v532 = vld [vmem:[#allocation8 + $0x60] sm:$0xf]
        %v533 = vld [vmem:[#allocation8 + $0x64] sm:$0xf]
        %v534 = vld [vmem:[#allocation8 + $0x68] sm:$0xf]
        %v535 = vld [vmem:[#allocation8 + $0x6c] sm:$0xf]
        %v536 = vld [vmem:[#allocation8 + $0x70] sm:$0xf]
        %v537 = vld [vmem:[#allocation8 + $0x74] sm:$0xf]
        %v538 = vld [vmem:[#allocation8 + $0x78] sm:$0xf]
        %v539 = vld [vmem:[#allocation8 + $0x7c] sm:$0xf]
        %v572 = vunpack.c.l.b16 %v508
        %v573 = vunpack.c.l.b16 %v509
        %v574 = vunpack.c.l.b16 %v510
        %v575 = vunpack.c.l.b16 %v511
        %v576 = vunpack.c.l.b16 %v512
        %v577 = vunpack.c.l.b16 %v513
        %v578 = vunpack.c.l.b16 %v514
        %v579 = vunpack.c.l.b16 %v515
        %v580 = vunpack.c.l.b16 %v516
        %v581 = vunpack.c.l.b16 %v517
        %v582 = vunpack.c.l.b16 %v518
        %v583 = vunpack.c.l.b16 %v519
        %v584 = vunpack.c.l.b16 %v520
        %v585 = vunpack.c.l.b16 %v521
        %v586 = vunpack.c.l.b16 %v522
        %v587 = vunpack.c.l.b16 %v523
        %v588 = vunpack.c.l.b16 %v524
        %v589 = vunpack.c.l.b16 %v525
        %v590 = vunpack.c.l.b16 %v526
        %v591 = vunpack.c.l.b16 %v527
        %v592 = vunpack.c.l.b16 %v528
        %v593 = vunpack.c.l.b16 %v529
        %v594 = vunpack.c.l.b16 %v530
        %v595 = vunpack.c.l.b16 %v531
        %v596 = vunpack.c.l.b16 %v532
        %v597 = vunpack.c.l.b16 %v533
        %v598 = vunpack.c.l.b16 %v534
        %v599 = vunpack.c.l.b16 %v535
        %v600 = vunpack.c.l.b16 %v536
        %v601 = vunpack.c.l.b16 %v537
        %v602 = vunpack.c.l.b16 %v538
        %v603 = vunpack.c.l.b16 %v539
        %v604 = vpack.c.b16 %v573, %v572
        %v605 = vpack.c.b16 %v575, %v574
        %v606 = vpack.c.b16 %v577, %v576
        %v607 = vpack.c.b16 %v579, %v578
        %v608 = vpack.c.b16 %v581, %v580
        %v609 = vpack.c.b16 %v583, %v582
        %v610 = vpack.c.b16 %v585, %v584
        %v611 = vpack.c.b16 %v587, %v586
        %v612 = vpack.c.b16 %v589, %v588
        %v613 = vpack.c.b16 %v591, %v590
        %v614 = vpack.c.b16 %v593, %v592
        %v615 = vpack.c.b16 %v595, %v594
        %v616 = vpack.c.b16 %v597, %v596
        %v617 = vpack.c.b16 %v599, %v598
        %v618 = vpack.c.b16 %v601, %v600
        %v619 = vpack.c.b16 %v603, %v602
        %636 = vmatprep.subr.bf16.mxu0 0
        %637 = vmatpush1.bf16.msra.mxu0 %v604
        %638 = vmatprep.subr.bf16.mxu0 0
        %639 = vmatpush1.bf16.msra.mxu0 %v605
        %640 = vmatprep.subr.bf16.mxu0 0
        %641 = vmatpush1.bf16.msra.mxu0 %v606
        %642 = vmatprep.subr.bf16.mxu0 0
        %643 = vmatpush1.bf16.msra.mxu0 %v607
        %644 = vmatprep.subr.bf16.mxu0 0
        %645 = vmatpush1.bf16.msra.mxu0 %v608
        %646 = vmatprep.subr.bf16.mxu0 0
        %647 = vmatpush1.bf16.msra.mxu0 %v609
        %648 = vmatprep.subr.bf16.mxu0 0
        %649 = vmatpush1.bf16.msra.mxu0 %v610
        %650 = vmatprep.subr.bf16.mxu0 0
        %651 = vmatpush1.bf16.msra.mxu0 %v611
        %652 = vmatprep.subr.bf16.mxu0 0
        %653 = vmatpush1.bf16.msra.mxu0 %v612
        %654 = vmatprep.subr.bf16.mxu0 0
        %655 = vmatpush1.bf16.msra.mxu0 %v613
        %656 = vmatprep.subr.bf16.mxu0 0
        %657 = vmatpush1.bf16.msra.mxu0 %v614
        %658 = vmatprep.subr.bf16.mxu0 0
        %659 = vmatpush1.bf16.msra.mxu0 %v615
        %660 = vmatprep.subr.bf16.mxu0 0
        %661 = vmatpush1.bf16.msra.mxu0 %v616
        %662 = vmatprep.subr.bf16.mxu0 0
        %663 = vmatpush1.bf16.msra.mxu0 %v617
        %664 = vmatprep.subr.bf16.mxu0 0
        %665 = vmatpush1.bf16.msra.mxu0 %v618
        %666 = vmatprep.subr.bf16.mxu0 0
        %667 = vmatpush1.bf16.msra.mxu0 %v619
        %668 = vmatprep.mubr.bf16.mxu0 %v475
        %669 = vmatmul.mubr.bf16.gmra.mrb[0].mxu0 %v474
        %v670 = vpop.f32.mrb[0].mxu0
        %v671 = vadd.f32 0.0, %v670
        %v672 = vpop.f32.mrb[0].mxu0
        %v673 = vpop.f32.mrb[0].mxu0
        %v674 = vpop.f32.mrb[0].mxu0
        %675 = vdwg.mxu0
        %v708 = vunpack.c.l.b16 %v476
        %v709 = vunpack.c.l.b16 %v477
        %v710 = vunpack.c.l.b16 %v478
        %v711 = vunpack.c.l.b16 %v479
        %v712 = vunpack.c.l.b16 %v480
        %v713 = vunpack.c.l.b16 %v481
        %v714 = vunpack.c.l.b16 %v482
        %v715 = vunpack.c.l.b16 %v483
        %v716 = vunpack.c.l.b16 %v484
        %v717 = vunpack.c.l.b16 %v485
        %v718 = vunpack.c.l.b16 %v486
        %v719 = vunpack.c.l.b16 %v487
        %v720 = vunpack.c.l.b16 %v488
        %v721 = vunpack.c.l.b16 %v489
        %v722 = vunpack.c.l.b16 %v490
        %v723 = vunpack.c.l.b16 %v491
        %v724 = vunpack.c.l.b16 %v492
        %v725 = vunpack.c.l.b16 %v493
        %v726 = vunpack.c.l.b16 %v494
        %v727 = vunpack.c.l.b16 %v495
        %v728 = vunpack.c.l.b16 %v496
        %v729 = vunpack.c.l.b16 %v497
        %v730 = vunpack.c.l.b16 %v498
        %v731 = vunpack.c.l.b16 %v499
        %v732 = vunpack.c.l.b16 %v500
        %v733 = vunpack.c.l.b16 %v501
        %v734 = vunpack.c.l.b16 %v502
        %v735 = vunpack.c.l.b16 %v503
        %v736 = vunpack.c.l.b16 %v504
        %v737 = vunpack.c.l.b16 %v505
        %v738 = vunpack.c.l.b16 %v506
        %v739 = vunpack.c.l.b16 %v507
        %v740 = vpack.c.b16 %v709, %v708
        %v741 = vpack.c.b16 %v711, %v710
        %v742 = vpack.c.b16 %v713, %v712
        %v743 = vpack.c.b16 %v715, %v714
        %v744 = vpack.c.b16 %v717, %v716
        %v745 = vpack.c.b16 %v719, %v718
        %v746 = vpack.c.b16 %v721, %v720
        %v747 = vpack.c.b16 %v723, %v722
        %v748 = vpack.c.b16 %v725, %v724
        %v749 = vpack.c.b16 %v727, %v726
        %v750 = vpack.c.b16 %v729, %v728
        %v751 = vpack.c.b16 %v731, %v730
        %v752 = vpack.c.b16 %v733, %v732
        %v753 = vpack.c.b16 %v735, %v734
        %v754 = vpack.c.b16 %v737, %v736
        %v755 = vpack.c.b16 %v739, %v738
        %772 = vmatprep.subr.bf16.mxu0 0
        %773 = vmatpush1.bf16.msra.mxu0 %v740
        %774 = vmatprep.subr.bf16.mxu0 0
        %775 = vmatpush1.bf16.msra.mxu0 %v741
        %776 = vmatprep.subr.bf16.mxu0 0
        %777 = vmatpush1.bf16.msra.mxu0 %v742
        %778 = vmatprep.subr.bf16.mxu0 0
        %779 = vmatpush1.bf16.msra.mxu0 %v743
        %780 = vmatprep.subr.bf16.mxu0 0
        %781 = vmatpush1.bf16.msra.mxu0 %v744
        %782 = vmatprep.subr.bf16.mxu0 0
        %783 = vmatpush1.bf16.msra.mxu0 %v745
        %784 = vmatprep.subr.bf16.mxu0 0
        %785 = vmatpush1.bf16.msra.mxu0 %v746
        %786 = vmatprep.subr.bf16.mxu0 0
        %787 = vmatpush1.bf16.msra.mxu0 %v747
        %788 = vmatprep.subr.bf16.mxu0 0
        %789 = vmatpush1.bf16.msra.mxu0 %v748
        %790 = vmatprep.subr.bf16.mxu0 0
        %791 = vmatpush1.bf16.msra.mxu0 %v749
        %792 = vmatprep.subr.bf16.mxu0 0
        %793 = vmatpush1.bf16.msra.mxu0 %v750
        %794 = vmatprep.subr.bf16.mxu0 0
        %795 = vmatpush1.bf16.msra.mxu0 %v751
        %796 = vmatprep.subr.bf16.mxu0 0
        %797 = vmatpush1.bf16.msra.mxu0 %v752
        %798 = vmatprep.subr.bf16.mxu0 0
        %799 = vmatpush1.bf16.msra.mxu0 %v753
        %800 = vmatprep.subr.bf16.mxu0 0
        %801 = vmatpush1.bf16.msra.mxu0 %v754
        %802 = vmatprep.subr.bf16.mxu0 0
        %803 = vmatpush1.bf16.msra.mxu0 %v755
        %804 = vmatprep.mubr.bf16.mxu0 %v471
        %805 = vmatmul.mubr.bf16.gmra.mrb[0].mxu0 %v470
        %v806 = vpop.f32.mrb[0].mxu0
        %v807 = vadd.f32 %v671, %v806
        %v808 = vpop.f32.mrb[0].mxu0
        %v809 = vpop.f32.mrb[0].mxu0
        %v810 = vpop.f32.mrb[0].mxu0
        %811 = vdwg.mxu0
        %v812 = vld [vmem:[%s4] sm:$0x1]
        %v814 = vlaneseq
        %v815 = vshrl.u32 %v814, 7
        %v816 = vsub.s32 0, %v815
        %v817 = vrot.slane %v812, %v816
        %v819 = vadd.f32 %v807, %v817
        %v820 = vmax.f32 %v819, 0.0
        %v821 = vld [vmem:[#allocation10] sm:$0xff]
        %v822 = vld [vmem:[#allocation10 + $0x8] sm:$0xff]
        %v823 = vld [vmem:[#allocation10 + $0x10] sm:$0xff]
        %v824 = vld [vmem:[#allocation10 + $0x18] sm:$0xff]
        %v825 = vld [vmem:[#allocation10 + $0x20] sm:$0xff]
        %v826 = vld [vmem:[#allocation10 + $0x28] sm:$0xff]
        %v827 = vld [vmem:[#allocation10 + $0x30] sm:$0xff]
        %v828 = vld [vmem:[#allocation10 + $0x38] sm:$0xff]
        %v829 = vld [vmem:[#allocation10 + $0x40] sm:$0xff]
        %v830 = vld [vmem:[#allocation10 + $0x48] sm:$0xff]
        %v831 = vld [vmem:[#allocation10 + $0x50] sm:$0xff]
        %v832 = vld [vmem:[#allocation10 + $0x58] sm:$0xff]
        %v833 = vld [vmem:[#allocation10 + $0x60] sm:$0xff]
        %v834 = vld [vmem:[#allocation10 + $0x68] sm:$0xff]
        %v835 = vld [vmem:[#allocation10 + $0x70] sm:$0xff]
        %v836 = vld [vmem:[#allocation10 + $0x78] sm:$0xff]
        %v837 = vld [vmem:[%s6] sm:$0x1]
        %v839 = vlaneseq
        %v840 = vshrl.u32 %v839, 7
        %v841 = vsub.s32 0, %v840
        %v842 = vrot.slane %v837, %v841
        %844 = vmatprep.subr.mxu0 0.0
        %845 = vmatpush1.msra.mxu0 %v821
        %846 = vmatprep.subr.mxu0 0.0
        %847 = vmatpush1.msra.mxu0 %v822
        %848 = vmatprep.subr.mxu0 0.0
        %849 = vmatpush1.msra.mxu0 %v823
        %850 = vmatprep.subr.mxu0 0.0
        %851 = vmatpush1.msra.mxu0 %v824
        %852 = vmatprep.subr.mxu0 0.0
        %853 = vmatpush1.msra.mxu0 %v825
        %854 = vmatprep.subr.mxu0 0.0
        %855 = vmatpush1.msra.mxu0 %v826
        %856 = vmatprep.subr.mxu0 0.0
        %857 = vmatpush1.msra.mxu0 %v827
        %858 = vmatprep.subr.mxu0 0.0
        %859 = vmatpush1.msra.mxu0 %v828
        %860 = vmatprep.subr.mxu0 0.0
        %861 = vmatpush1.msra.mxu0 %v829
        %862 = vmatprep.subr.mxu0 0.0
        %863 = vmatpush1.msra.mxu0 %v830
        %864 = vmatprep.subr.mxu0 0.0
        %865 = vmatpush1.msra.mxu0 %v831
        %866 = vmatprep.subr.mxu0 0.0
        %867 = vmatpush1.msra.mxu0 %v832
        %868 = vmatprep.subr.mxu0 0.0
        %869 = vmatpush1.msra.mxu0 %v833
        %870 = vmatprep.subr.mxu0 0.0
        %871 = vmatpush1.msra.mxu0 %v834
        %872 = vmatprep.subr.mxu0 0.0
        %873 = vmatpush1.msra.mxu0 %v835
        %874 = vmatprep.subr.mxu0 0.0
        %875 = vmatpush1.msra.mxu0 %v836
        %876 = vmatprep.subr.mxu0 0.0
        %877 = vmatpush1.msra.mxu0 0.0
        %878 = vmatprep.subr.mxu0 0.0
        %879 = vmatpush1.msra.mxu0 0.0
        %880 = vmatprep.subr.mxu0 0.0
        %881 = vmatpush1.msra.mxu0 0.0
        %882 = vmatprep.subr.mxu0 0.0
        %883 = vmatpush1.msra.mxu0 0.0
        %884 = vmatprep.subr.mxu0 0.0
        %885 = vmatpush1.msra.mxu0 0.0
        %886 = vmatprep.subr.mxu0 0.0
        %887 = vmatpush1.msra.mxu0 0.0
        %888 = vmatprep.subr.mxu0 0.0
        %889 = vmatpush1.msra.mxu0 0.0
        %890 = vmatprep.subr.mxu0 0.0
        %891 = vmatpush1.msra.mxu0 0.0
        %892 = vmatprep.subr.mxu0 0.0
        %893 = vmatpush1.msra.mxu0 0.0
        %894 = vmatprep.subr.mxu0 0.0
        %895 = vmatpush1.msra.mxu0 0.0
        %896 = vmatprep.subr.mxu0 0.0
        %897 = vmatpush1.msra.mxu0 0.0
        %898 = vmatprep.subr.mxu0 0.0
        %899 = vmatpush1.msra.mxu0 0.0
        %900 = vmatprep.subr.mxu0 0.0
        %901 = vmatpush1.msra.mxu0 0.0
        %902 = vmatprep.subr.mxu0 0.0
        %903 = vmatpush1.msra.mxu0 0.0
        %904 = vmatprep.subr.mxu0 0.0
        %905 = vmatpush1.msra.mxu0 0.0
        %906 = vmatprep.subr.mxu0 0.0
        %907 = vmatpush1.msra.mxu0 0.0
        %908 = vmatprep.mubr.f32.mxu0 0.0
        %909 = vmatmul.mubr.f32.gmra.mrb[0].mxu0 %v820
        %v910 = vpop.f32.mrb[0].mxu0
        %v911 = vadd.f32 %v842, %v910
        %v912 = vpop.f32.mrb[0].mxu0
        %913 = vdwg.mxu0
        %v914 = vld [vmem:[%s8] sm:$0xf]
        %v915 = vld [vmem:[%s7] sm:$0x1]
        %v916 = vmul.f32 %v911, 2.0
        %v918 = vlaneseq
        %v919 = vshrl.u32 %v918, 7
        %v920 = vsub.s32 0, %v919
        %v921 = vrot.slane %v915, %v920
        %v923 = vsub.f32 %v921, %v916
        %v924 = vlaneseq
        %v925 = vand.u32 %v924, 127
        %926 = vmin.xlane.f32.xlu0 %v923
        %v927 = vpop.xlane.xlu0 %926
        %vm928 = vcmp.eq.f32.partialorder %v923, %v927
        %v929 = vsel %vm928, %v925, 128
        %v930 = vand.u32 %v929, 65535
        %v931 = vshra.s32 %v929, 16
        %v932 = vcvt.s32.f32 %v930
        %v933 = vcvt.s32.f32 %v931
        %934 = vmin.xlane.f32.xlu0 %v933
        %v935 = vpop.xlane.xlu0 %934
        %vm936 = vcmp.eq.f32.partialorder %v933, %v935
        %v937 = vsel %vm936, %v932, inf
        %938 = vmin.xlane.f32.xlu0 %v937
        %v939 = vpop.xlane.xlu0 %938
        %v940 = vcvt.f32.s32 %v939
        %v941 = vcvt.f32.s32 %v935
        %v942 = vshll.u32 %v941, 16
        %v943 = vadd.s32 %v942, %v940
        %vm944 = vcmp.eq.s32.totalorder %v925, %v943
        %v945 = vsel %vm944, 1, 0
        %v946 = vcvt.s32.f32 %v945
        %v947 = vlaneseq
        %v948 = vshrl.u32 %v947, 7
        %v949 = vsub.s32 0, %v948
        %v950 = vrot.slane %v914, %v949
        %v951 = vmul.f32 %v946, %v950
        %952 = vadd.xlane.f32.xlu0 %v951
        %v953 = vpop.xlane.xlu0 %952
        %v954 = vlaneseq
        %v955 = vshrl.u32 %v954, 7
        %v956 = vsub.s32 1, %v955
        %v957 = vrot.slane %v914, %v956
        %v958 = vmul.f32 %v946, %v957
        %959 = vadd.xlane.f32.xlu0 %v958
        %v960 = vpop.xlane.xlu0 %959
        %v961 = vlaneseq
        %v962 = vshrl.u32 %v961, 7
        %v963 = vsub.s32 2, %v962
        %v964 = vrot.slane %v914, %v963
        %v965 = vmul.f32 %v946, %v964
        %966 = vadd.xlane.f32.xlu0 %v965
        %v967 = vpop.xlane.xlu0 %966
        %v968 = vlaneseq
        %v969 = vshrl.u32 %v968, 7
        %v970 = vsub.s32 3, %v969
        %v971 = vrot.slane %v914, %v970
        %v972 = vmul.f32 %v946, %v971
        %973 = vadd.xlane.f32.xlu0 %v972
        %v974 = vpop.xlane.xlu0 %973
        %vm975 = vcmask 7168
        %v976 = vsel %vm975, %v953, %v960
        %vm977 = vcmask 15360
        %v978 = vsel %vm977, %v976, %v967
        %vm979 = vcmask 23552
        %v980 = vsel %vm979, %v978, %v974
        %v981 = vsub.f32 %v980, %v911
        %v982 = vmul.f32 %v981, %v981
        %vm983 = vcmask 31744
        %v984 = vsel %vm983, %v982, 0.0
        %985 = vadd.xlane.f32.xlu0 %v984
        %v986 = vpop.xlane.xlu0 %985
        %v987 = vrcp.pop 4.0
        %v988 = vmul.f32 %v986, %v987
        %v989 = vmul.f32 %v988, 2.0
        %v990 = vsub.s32 %v943, 4
        %v991 = vcvt.s32.f32 %v990
        %v992 = vsel %vm983, %v980, %v989
        %vm993 = vcmask 39936
        %v994 = vsel %vm993, %v992, %v991
        %vm995 = vcmask 48128
        %v996 = vsel %vm995, %v994, 0.0
        %vm997 = vcmask 64512
        %998 = vst.msk [vmem:[%s466] sm:$0xff] %vm997, %v996
        %s999 = smul.u32 %s32, 8
        %v1000 = vlaneseq
        %v1001 = vshrl.u32 %v1000, 7
        %v1002 = vstv %s999
        %v1003 = vadd.s32 %v1002, %v1001
        %vm1004 = vcmp.lt.s32.totalorder %v1003, 12
        %v1005 = vsel %vm1004, 1, 0
        %v1006 = vcvt.s32.f32 %v1005
        %v1007 = vmul.f32 %v946, %v1006
        %v1008 = vrot.slane %v1007, 4
        %v1009 = vadd.f32 %v1007, %v1008
        %v1010 = vrot.slane %v1009, 2
        %v1011 = vadd.f32 %v1009, %v1010
        %v1012 = vrot.slane %v1011, 1
        %v1013 = vadd.f32 %v1011, %v1012
        %1014 = vst [vmem:[%s462] sm:$0x1] %v1013
        %p1015 = scmp.lt.s32.totalorder %s32, 1
        %s1016 = scalar_select %p1015, %s32, 1
        %s1017 = smul.addr %s1016, 8
        %s1018 = scalar_lea.vmem %s9, %s1017
        %s1019 = sand.u32 %s265, 1
        %s1020 = scalar_lea.sflag [#allocation4], %s1019
        %s1021 = sand.u32 %s265, 1
        %s1022 = scalar_lea.vmem [#allocation11], %s1021
        // Predicated region
        $region77: #{tpu_custom_call.1} parent=55 // pred_check
          %p1023 = pneg %p249
        $region78: #{tpu_custom_call.1} parent=55 // pred_check_branch
          %1025 = sbr.rel (%p1023) target = $region80
        $region79: #{tpu_custom_call.1} parent=55 // pred_region
          _
        $region80: #{tpu_custom_call.1} parent=55 // pred_fallthru
          _
        // Predicated region
        $region81: #{tpu_custom_call.1} parent=55 // pred_check
          %p1026 = pneg %p275
        $region82: #{tpu_custom_call.1} parent=55 // pred_check_branch
          %1028 = sbr.rel (%p1026) target = $region84
        $region83: #{tpu_custom_call.1} parent=55 // pred_region
          %s1030 = ssub.s32 16, 16
          %1031 = vsyncadd %s1020, %s1030
          %s1032 = smul.addr %s32, 16
          %s1033 = scalar_lea.hbm %s10, %s1032
          %s1035 = sshll.u32 %s1022, 4
          %s1036 = int_to_ptr.vmem [resolvable:$true] %s1035
          %1038 = dma.vmem_to_hbm [thread:$0]  %s1036, 16, %s1033, %s1020
        $region84: #{tpu_custom_call.1} parent=55 // pred_fallthru
          _
      $region56: #{tpu_custom_call.1} parent=5 // pred_fallthru
        _
      %p1039 = scmp.le.s32.totalorder 2, %s27
      // Predicated region
      $region85: #{tpu_custom_call.1} parent=5 // pred_check
        %p1040 = pneg %p1039
      $region86: #{tpu_custom_call.1} parent=5 // pred_check_branch
        %1042 = sbr.rel (%p1040) target = $region88
      $region87: #{tpu_custom_call.1} parent=5 // pred_region
        %s1043 = ssub.s32 %s27, 2
        // Predicated region
        $region89: #{tpu_custom_call.1} parent=87 // pred_check
          %p1044 = pneg %p255
        $region90: #{tpu_custom_call.1} parent=87 // pred_check_branch
          %1046 = sbr.rel (%p1044) target = $region92
        $region91: #{tpu_custom_call.1} parent=87 // pred_region
          %p1047 = scmp.lt.s32.totalorder %s33, 1
          %s1048 = scalar_select %p1047, %s33, 1
          %s1049 = smul.addr %s1048, 8
          %s1050 = scalar_lea.vmem %s9, %s1049
        $region92: #{tpu_custom_call.1} parent=87 // pred_fallthru
          _
        // Predicated region
        $region93: #{tpu_custom_call.1} parent=87 // pred_check
          %p1051 = pneg %p281
        $region94: #{tpu_custom_call.1} parent=87 // pred_check_branch
          %1053 = sbr.rel (%p1051) target = $region96
        $region95: #{tpu_custom_call.1} parent=87 // pred_region
          %s1054 = sand.u32 %s266, 1
          %s1055 = scalar_lea.sflag [#allocation4], %s1054
          %s1056 = sand.u32 %s266, 1
          %s1057 = scalar_lea.vmem [#allocation11], %s1056
          %1058 = dma.done %s1055, 16
        $region96: #{tpu_custom_call.1} parent=87 // pred_fallthru
          _
      $region88: #{tpu_custom_call.1} parent=5 // pred_fallthru
        _
    $region6: #{tpu_custom_call.1} parent=1 // loop_footer
      %s31 = sadd.s32 1, %s27
    $region7: #{tpu_custom_call.1} parent=1 // loop_footer_branch
      %26 = sbr.rel target = $region3
    $region8: #{tpu_custom_call.1} parent=1 // loop_exit
      _
    %1059 = vsyncpa [#allocation3], 1
    %s1060 = scalar_lea.sflag [#allocation3], 1
    %1061 = vsyncpa %s1060, 1
    %1062 = vsyncpa [#allocation6], 1
    %s1063 = scalar_lea.sflag [#allocation6], 1
    %1064 = vsyncpa %s1063, 1
    %1065 = vsyncpa [#allocation9], 1
    %1066 = vsyncpa [#allocation4], 1
    %s1067 = scalar_lea.sflag [#allocation4], 1
    %1068 = vsyncpa %s1067, 1

</llo_original>
